<compile_context>
chip_gen: v7x
topology: tpu7x:2x2x1
jax: 0.10.0
libtpu: 0.0.40
codegen_flags: <defaults>
</compile_context>

<pallas_src>
import jax
import jax.numpy as jnp
from jax.experimental import pallas as pl
from jax.experimental.pallas import tpu as pltpu


def _mlp_kernel(p_ref, x_ref, o_ref):
    # p_ref: SMEM (6,) f32 = [w1_0, w1_1, w1_2, b1, w2, b2]
    # x_ref: VMEM (3, TB) f32  -- batch on the 128-lane axis
    # o_ref: VMEM (1, TB) f32
    # Hoist the scalar parameter reads (scalar path, one sld each).
    w10 = p_ref[0]
    w11 = p_ref[1]
    w12 = p_ref[2]
    b1 = p_ref[3]
    w2 = p_ref[4]
    b2 = p_ref[5]

    x0 = x_ref[0:1, :]
    x1 = x_ref[1:2, :]
    x2 = x_ref[2:3, :]

    # Linear(3, 1): three VPU multiply-adds per vreg (no MXU pass).
    h = x0 * w10 + x1 * w11 + x2 * w12 + b1
    # ReLU
    h = jnp.maximum(h, 0.0)
    # Linear(1, 1)
    o_ref[...] = h * w2 + b2


def custom_network_forward(x, w1, b1, w2, b2, *, block_b=256 * 1024):
    """x: (B, 3) f32; w1: (3, 1); b1: (1, 1); w2: (1, 1); b2: (1, 1).

    Returns (B, 1) f32, matching PyTorch's CustomNetwork.forward.
    """
    B = x.shape[0]

    # Pack all parameters into one small SMEM scalar vector.
    params = jnp.concatenate(
        [w1.reshape(-1), b1.reshape(-1), w2.reshape(-1), b2.reshape(-1)]
    ).astype(jnp.float32)  # (6,)

    # Lane-dense layout: features on the sublane axis, batch on the lane axis.
    xt = x.astype(jnp.float32).T  # (3, B)

    # Pad batch up to a multiple of the block width (>= one 128-lane tile).
    bp = ((B + 127) // 128) * 128
    tb = min(block_b, bp)              # block_b is a multiple of 128
    bp = ((bp + tb - 1) // tb) * tb
    if bp != B:
        xt = jnp.pad(xt, ((0, 0), (0, bp - B)))

    out = pl.pallas_call(
        _mlp_kernel,
        out_shape=jax.ShapeDtypeStruct((1, bp), jnp.float32),
        grid=(bp // tb,),
        in_specs=[
            # Whole params vector in SMEM, untiled.
            pl.BlockSpec(memory_space=pltpu.MemorySpace.SMEM),
            # Lane-dense x blocks.
            pl.BlockSpec((3, tb), lambda i: (0, i)),
        ],
        out_specs=pl.BlockSpec((1, tb), lambda i: (0, i)),
        compiler_params=pltpu.CompilerParams(
            dimension_semantics=("parallel",),
        ),
    )(params, xt)

    # Drop padding, return PyTorch-shaped (B, 1).
    return out[:, :B].T


def init_params(key):
    """Deterministic init mirroring PyTorch nn.Linear default:
       U(-1/sqrt(fan_in), 1/sqrt(fan_in)) for weights and biases.
       Weights stored as (in_features, out_features) == PyTorch weight.T."""
    k1, k2, k3, k4 = jax.random.split(key, 4)
    bound1 = 1.0 / jnp.sqrt(3.0)   # Linear(3, 1): fan_in = 3
    bound2 = 1.0                   # Linear(1, 1): fan_in = 1
    w1 = jax.random.uniform(k1, (3, 1), jnp.float32, -bound1, bound1)
    b1 = jax.random.uniform(k2, (1, 1), jnp.float32, -bound1, bound1)
    w2 = jax.random.uniform(k3, (1, 1), jnp.float32, -bound2, bound2)
    b2 = jax.random.uniform(k4, (1, 1), jnp.float32, -bound2, bound2)
    return w1, b1, w2, b2


def reference_forward(x, w1, b1, w2, b2):
    h = jnp.maximum(x @ w1 + b1, 0.0)
    return h @ w2 + b2


if __name__ == "__main__":
    key = jax.random.PRNGKey(0)
    k_x, k_p = jax.random.split(key)

    B = 8
    x = jax.random.normal(k_x, (B, 3), jnp.float32)
    w1, b1, w2, b2 = init_params(k_p)

    out = custom_network_forward(x, w1, b1, w2, b2)
    out = jax.block_until_ready(out)

    ref = reference_forward(x, w1, b1, w2, b2)
    assert out.shape == (B, 1)
    assert jnp.allclose(out, ref, atol=1e-5, rtol=1e-5)

    print("KERNEL_OK")
</pallas_src>

<mosaic_0001>
module attributes {stable_mosaic.version = 11 : i64} {
  func.func @_mlp_kernel(%arg0: i32, %arg1: memref<6xf32, #tpu.memory_space<smem>>, %arg2: memref<3x128xf32, #tpu.memory_space<vmem>>, %arg3: memref<1x128xf32, #tpu.memory_space<vmem>>) attributes {dimension_semantics = [#tpu.dimension_semantics<parallel>], iteration_bounds = array<i64: 1>, scalar_prefetch = 0 : i64, scratch_operands = 0 : i64, tpu.core_type = #tpu.core_type<tc>, window_params = [{transform_indices = @transform_0, window_bounds = array<i64: 6>}, {transform_indices = @transform_1, window_bounds = array<i64: 3, 128>}, {transform_indices = @transform_2, window_bounds = array<i64: 1, 128>}]} {
    %c0 = arith.constant 0 : index
    %0 = memref.load %arg1[%c0] : memref<6xf32, #tpu.memory_space<smem>>
    %c1 = arith.constant 1 : index
    %1 = memref.load %arg1[%c1] : memref<6xf32, #tpu.memory_space<smem>>
    %c2 = arith.constant 2 : index
    %2 = memref.load %arg1[%c2] : memref<6xf32, #tpu.memory_space<smem>>
    %c3 = arith.constant 3 : index
    %3 = memref.load %arg1[%c3] : memref<6xf32, #tpu.memory_space<smem>>
    %c4 = arith.constant 4 : index
    %4 = memref.load %arg1[%c4] : memref<6xf32, #tpu.memory_space<smem>>
    %c5 = arith.constant 5 : index
    %5 = memref.load %arg1[%c5] : memref<6xf32, #tpu.memory_space<smem>>
    %c0_0 = arith.constant 0 : index
    %c0_1 = arith.constant 0 : index
    %6 = vector.load %arg2[%c0_0, %c0_1] : memref<3x128xf32, #tpu.memory_space<vmem>>, vector<1x128xf32>
    %c1_2 = arith.constant 1 : index
    %c0_3 = arith.constant 0 : index
    %7 = vector.load %arg2[%c1_2, %c0_3] : memref<3x128xf32, #tpu.memory_space<vmem>>, vector<1x128xf32>
    %c2_4 = arith.constant 2 : index
    %c0_5 = arith.constant 0 : index
    %8 = vector.load %arg2[%c2_4, %c0_5] : memref<3x128xf32, #tpu.memory_space<vmem>>, vector<1x128xf32>
    %9 = vector.broadcast %0 : f32 to vector<1x128xf32>
    %10 = arith.mulf %6, %9 : vector<1x128xf32>
    %11 = vector.broadcast %1 : f32 to vector<1x128xf32>
    %12 = arith.mulf %7, %11 : vector<1x128xf32>
    %13 = arith.addf %10, %12 : vector<1x128xf32>
    %14 = vector.broadcast %2 : f32 to vector<1x128xf32>
    %15 = arith.mulf %8, %14 : vector<1x128xf32>
    %16 = arith.addf %13, %15 : vector<1x128xf32>
    %17 = vector.broadcast %3 : f32 to vector<1x128xf32>
    %18 = arith.addf %16, %17 : vector<1x128xf32>
    %cst = arith.constant 0.000000e+00 : f32
    %19 = vector.broadcast %cst : f32 to vector<1x128xf32>
    %20 = arith.maximumf %18, %19 : vector<1x128xf32>
    %21 = vector.broadcast %4 : f32 to vector<1x128xf32>
    %22 = arith.mulf %20, %21 : vector<1x128xf32>
    %23 = vector.broadcast %5 : f32 to vector<1x128xf32>
    %24 = arith.addf %22, %23 : vector<1x128xf32>
    %c0_6 = arith.constant 0 : index
    %c0_7 = arith.constant 0 : index
    %25 = vector.load %arg3[%c0_6, %c0_7] : memref<1x128xf32, #tpu.memory_space<vmem>>, vector<1x128xf32>
    tpu.vector_store %arg3[%c0_6, %c0_7], %24 {strides = array<i32>} : memref<1x128xf32, #tpu.memory_space<vmem>>, vector<1x128xf32>,
    return
  }
  func.func @transform_0(%arg0: i32) -> i32 {
    %c0_i32 = arith.constant 0 : i32
    %c0_i32_0 = arith.constant 0 : i32
    return %c0_i32 : i32
  }
  func.func @transform_1(%arg0: i32) -> (i32, i32) {
    %c0_i32 = arith.constant 0 : i32
    %c0_i32_0 = arith.constant 0 : i32
    return %c0_i32, %arg0 : i32, i32
  }
  func.func @transform_2(%arg0: i32) -> (i32, i32) {
    %c0_i32 = arith.constant 0 : i32
    %c0_i32_0 = arith.constant 0 : i32
    return %c0_i32, %arg0 : i32, i32
  }
}

</mosaic_0001>

<llo_original>
// kernel: tpu_custom_call.1
$region0: #{tpu_custom_call.1}
  #allocation0 [shape = 'u32[]', space=smem, size = 0x4, offset = 0x4, fixed_abs, tag = 'smem constant byte address 0x4 - core index']
  #allocation1 [shape = 'u32[144,128]{1,0:T(1,128)}', space=vmem, size = 0x12000, scoped, tag = 'internal scratch']
  %s0 = inlined_call_operand.hbm [shape: f32[6], index: 0, kind: input, shape index: {}]
  %s1 = inlined_call_operand.hbm [shape: f32[3,128], index: 1, kind: input, shape index: {}]
  %s2 = inlined_call_operand.hbm [shape: f32[1,128], index: 2, kind: output, shape index: {}]
  %s3 = sld [smem:[#allocation0]]
  $region26: #{tpu_custom_call.1} parent=0
    _
  %s5 = ssub.s32 1, %s3
  %s6 = scalar_select 0, %s5, %s3
  $region1: #{tpu_custom_call.1} parent=0
    #allocation2 [shape = 'u8[512]{0}', space=smem, size = 0x200, scoped, tag = 'input window, operand 0, single buffered']
    #allocation3 [shape = 's32[1]{0}', space=sflag, size = 0x4, scoped, tag = 'scoped memory for tpu_custom_call.1']
    #allocation4 [shape = 's32[1]{0}', space=sflag, size = 0x4, scoped, tag = 'scoped memory for tpu_custom_call.1']
    #allocation5 [shape = 's32[1]{0}', space=sflag, size = 0x4, scoped, tag = 'scoped memory for tpu_custom_call.1']
    #allocation6 [shape = 'u8[2048]{0}', space=vmem, size = 0x800, scoped, tag = 'input window, operand 1, single buffered']
    #allocation7 [shape = 'u8[512]{0}', space=vmem, size = 0x400, scoped, tag = 'output window, operand 0, single buffered']
    %7 = vsyncpa [#allocation5], 0
    %8 = vsyncpa [#allocation3], 0
    %9 = vsyncpa [#allocation4], 0
    // Predicated region
    $region2: #{tpu_custom_call.1} parent=1 // pred_check
      _
    $region3: #{tpu_custom_call.1} parent=1 // pred_check_branch
      %11 = sbr.rel (0) target = $region5
    $region4: #{tpu_custom_call.1} parent=1 // pred_region
      %s13 = ssub.s32 16, 16
      %14 = vsyncadd [#allocation5], %s13
      %17 = dma.hbm_to_smem %s0, 16, [#allocation2], [#allocation5]
    $region5: #{tpu_custom_call.1} parent=1 // pred_fallthru
      _
    // Predicated region
    $region6: #{tpu_custom_call.1} parent=1 // pred_check
      _
    $region7: #{tpu_custom_call.1} parent=1 // pred_check_branch
      %19 = sbr.rel (0) target = $region9
    $region8: #{tpu_custom_call.1} parent=1 // pred_region
      %s21 = ssub.s32 64, 64
      %22 = vsyncadd [#allocation3], %s21
      %s24 = sshll.u32 [#allocation6], 4
      %s25 = int_to_ptr.vmem [resolvable:$true] %s24
      %27 = dma.hbm_to_vmem [thread:$0]  %s1, 64, %s25, [#allocation3]
    $region9: #{tpu_custom_call.1} parent=1 // pred_fallthru
      _
    // Predicated region
    $region10: #{tpu_custom_call.1} parent=1 // pred_check
      _
    $region11: #{tpu_custom_call.1} parent=1 // pred_check_branch
      %29 = sbr.rel (0) target = $region13
    $region12: #{tpu_custom_call.1} parent=1 // pred_region
      %30 = dma.done [#allocation5], 16
    $region13: #{tpu_custom_call.1} parent=1 // pred_fallthru
      _
    // Predicated region
    $region14: #{tpu_custom_call.1} parent=1 // pred_check
      _
    $region15: #{tpu_custom_call.1} parent=1 // pred_check_branch
      %32 = sbr.rel (0) target = $region17
    $region16: #{tpu_custom_call.1} parent=1 // pred_region
      %33 = dma.done [#allocation3], 64
    $region17: #{tpu_custom_call.1} parent=1 // pred_fallthru
      _
    %34 = sfence
    %s35 = sld [smem:[#allocation2]]
    %s36 = sld [smem:[#allocation2 + $0x1]]
    %s37 = sld [smem:[#allocation2 + $0x2]]
    %s38 = sld [smem:[#allocation2 + $0x3]]
    %s39 = sld [smem:[#allocation2 + $0x4]]
    %s40 = sld [smem:[#allocation2 + $0x5]]
    %v41 = vld [vmem:[#allocation6] sm:$0x1]
    %v42 = vld [vmem:[#allocation6 + $0x1] sm:$0x1]
    %v43 = vld [vmem:[#allocation6 + $0x2] sm:$0x1]
    %v44 = vstv %s35
    %v45 = vmul.f32 %v41, %v44
    %v46 = vstv %s36
    %v47 = vmul.f32 %v42, %v46
    %v48 = vadd.f32 %v45, %v47
    %v49 = vstv %s37
    %v50 = vmul.f32 %v43, %v49
    %v51 = vadd.f32 %v48, %v50
    %v52 = vstv %s38
    %v53 = vadd.f32 %v51, %v52
    %v54 = vmax.f32 %v53, 0.0
    %v55 = vstv %s39
    %v56 = vmul.f32 %v54, %v55
    %v57 = vstv %s40
    %v58 = vadd.f32 %v56, %v57
    %59 = vst [vmem:[#allocation7] sm:$0x1] %v58
    // Predicated region
    $region18: #{tpu_custom_call.1} parent=1 // pred_check
      _
    $region19: #{tpu_custom_call.1} parent=1 // pred_check_branch
      %61 = sbr.rel (0) target = $region21
    $region20: #{tpu_custom_call.1} parent=1 // pred_region
      %s63 = ssub.s32 16, 16
      %64 = vsyncadd [#allocation4], %s63
      %s66 = sshll.u32 [#allocation7], 4
      %s67 = int_to_ptr.vmem [resolvable:$true] %s66
      %69 = dma.vmem_to_hbm [thread:$0]  %s67, 16, %s2, [#allocation4]
    $region21: #{tpu_custom_call.1} parent=1 // pred_fallthru
      _
    // Predicated region
    $region22: #{tpu_custom_call.1} parent=1 // pred_check
      _
    $region23: #{tpu_custom_call.1} parent=1 // pred_check_branch
      %71 = sbr.rel (0) target = $region25
    $region24: #{tpu_custom_call.1} parent=1 // pred_region
      %72 = dma.done [#allocation4], 16
    $region25: #{tpu_custom_call.1} parent=1 // pred_fallthru
      _
    %73 = vsyncpa [#allocation3], 1
    %74 = vsyncpa [#allocation4], 1
    %75 = vsyncpa [#allocation5], 1

</llo_original>
